<compile_context>
chip_gen: v7x
topology: tpu7x:2x2x1
jax: 0.10.0
libtpu: 0.0.40
codegen_flags: <defaults>
</compile_context>

<pallas_src>
import jax
import jax.numpy as jnp
from jax.experimental import pallas as pl
from jax.experimental.pallas import tpu as pltpu


def _sublane_multiple(itemsize):
    # Sublane packing per element size: f32 -> 8, bf16/f16 -> 16, int8/fp8 -> 32.
    return {4: 8, 2: 16, 1: 32}.get(int(itemsize), 8)


def _vmem_capacity_bytes():
    try:
        info = pltpu.get_tpu_info()
        for attr in ("vmem_capacity_bytes", "vmem_bytes", "vmem_size_bytes"):
            v = getattr(info, attr, None)
            if isinstance(v, int) and v > 0:
                return v
    except Exception:
        pass
    return 64 * 1024 * 1024  # conservative default: v7x per-TC ceiling


def _num_tensorcores():
    try:
        info = pltpu.get_tpu_info()
        for attr in ("num_cores", "core_count", "num_tensorcores",
                     "tensorcores_per_chip", "cores_per_chip"):
            v = getattr(info, attr, None)
            if isinstance(v, int) and 0 < v <= 16:
                return int(v)
    except Exception:
        pass
    try:
        v = getattr(jax.devices()[0], "num_cores", None)
        if isinstance(v, int) and 0 < v <= 16:
            return int(v)
    except Exception:
        pass
    return 1  # safe default: behave like a single-TC chip (v5e / v6e)


def _make_hm_sse_kernel(tile_n, tiles_per_chunk, last_tile, rem, acc_rows):
    def kernel(hm_p_ref, hm_g_ref, vis_ref, acc_ref):
        i = pl.program_id(1)

        @pl.when(i == 0)
        def _():
            acc_ref[...] = jnp.zeros_like(acc_ref)

        # Native-dtype loads; cast to f32 in-register.
        diff = hm_p_ref[...].astype(jnp.float32) - hm_g_ref[...].astype(jnp.float32)
        vis = vis_ref[...]  # (tile_n, 1) f32, cast in the wrapper (tiny array)

        def accumulate(w):
            # Vreg-aligned partial reduction: (tile_n, P) -> (acc_rows, P) via
            # elementwise adds of whole vregs (no per-step cross-sublane XLU work).
            if acc_rows == 1:
                acc_ref[...] += jnp.sum(w, axis=0, keepdims=True)
            else:
                p = w.shape[-1]
                acc_ref[...] += jnp.sum(
                    w.reshape(tile_n // acc_rows, acc_rows, p), axis=0)

        if rem == 0:
            # All tiles are full: no OOB rows, no masking on the hot path.
            accumulate(diff * diff * vis)
        else:
            tile_idx = pl.program_id(0) * tiles_per_chunk + i

            @pl.when(tile_idx != last_tile)
            def _():
                accumulate(diff * diff * vis)

            @pl.when(tile_idx == last_tile)
            def _():
                # Only the last tile is partial.  Its OOB rows contain whatever
                # padding Pallas left in the buffer (possibly NaN), so a select
                # -- not a multiply-by-zero -- is required to zero them.
                row = jax.lax.broadcasted_iota(jnp.int32, (tile_n, 1), 0)
                accumulate(jnp.where(row < rem, diff * diff * vis, 0.0))

    return kernel


def _choose_tile_n(n_rows, p, itemsize, sublane, max_tile_n, budget):
    # Budget covers the two double-buffered streamed inputs (hm_pred, hm_gt):
    # 2 inputs x 2 buffers x tile_n x P x itemsize <= budget.
    t = budget // (4 * p * itemsize)
    t = int(max(sublane, (t // sublane) * sublane))
    if max_tile_n is not None:
        t = max(sublane, (min(t, int(max_tile_n)) // sublane) * sublane)
    if n_rows <= t:
        return n_rows  # single tile: full-dim block is always legal
    return t


def pose3d_loss(hm_pred, hm_gt, pose_3d_pred, pose_3d_gt, vis_flag,
                *, max_tile_n=None, force_num_chunks=None):
    """Pallas implementation of Pose3DLoss.forward.

    hm_pred, hm_gt:           (B, J, H, W)   any float dtype
    pose_3d_pred, pose_3d_gt: (B, J, D)
    vis_flag:                 (B, J)
    Returns (hm_loss, pose_3d_loss) as f32 scalars.
    """
    assert hm_pred.shape == hm_gt.shape and hm_pred.ndim == 4
    assert pose_3d_pred.shape == pose_3d_gt.shape and pose_3d_pred.ndim == 3

    B, J, H, W = hm_pred.shape
    N = B * J
    P = H * W

    hm_p = hm_pred.reshape(N, P)        # free reshape; native dtype stays in HBM
    hm_g = hm_gt.reshape(N, P)
    vis = vis_flag.reshape(N, 1).astype(jnp.float32)   # tiny; cast once here

    itemsize = jnp.dtype(hm_pred.dtype).itemsize
    sublane = _sublane_multiple(itemsize)

    # Chip-aware VMEM budgeting (v7x has only 64 MiB/TC; v5e/v6e have 128 MiB).
    vmem_cap = _vmem_capacity_bytes()
    if vmem_cap >= 96 * 1024 * 1024:
        budget = 32 * 1024 * 1024
        vmem_limit = 64 * 1024 * 1024
    else:
        budget = 40 * 1024 * 1024
        vmem_limit = 56 * 1024 * 1024

    tile_n = _choose_tile_n(N, P, itemsize, sublane, max_tile_n, budget)
    total_tiles = int(pl.cdiv(N, tile_n))

    # 2 parallel chunks only when (a) the chip has >1 TensorCore and (b) the
    # tile count is even, so the grid tiles N exactly -> no duplicate-tile DMA.
    if force_num_chunks is not None:
        want_two = int(force_num_chunks) >= 2
    else:
        want_two = _num_tensorcores() >= 2
    num_chunks = 1
    if want_two and total_tiles >= 2:
        if total_tiles % 2 == 0:
            num_chunks = 2
        else:
            # Shrink tile_n a few sublane steps to make the tile count even.
            for cand in range(tile_n - sublane,
                              max(sublane, tile_n - 8 * sublane) - 1, -sublane):
                if cand >= sublane and int(pl.cdiv(N, cand)) % 2 == 0:
                    tile_n = cand
                    total_tiles = int(pl.cdiv(N, cand))
                    num_chunks = 2
                    break
    tiles_per_chunk = total_tiles // num_chunks       # exact: no duplicates
    last_tile = total_tiles - 1
    rem = N % tile_n                                  # 0 iff no partial tile
    acc_rows = 8 if tile_n % 8 == 0 else 1            # (8, P) resident accumulator

    def in_index_map(c, i):
        return (c * tiles_per_chunk + i, 0)           # never exceeds last_tile

    kernel = _make_hm_sse_kernel(tile_n, tiles_per_chunk, last_tile, rem, acc_rows)

    cost = pl.CostEstimate(
        flops=4 * N * P,
        transcendentals=0,
        bytes_accessed=2 * N * P * itemsize + N * 4 + num_chunks * acc_rows * P * 4,
    )

    partial_sse = pl.pallas_call(
        kernel,
        grid=(num_chunks, tiles_per_chunk),
        in_specs=[
            pl.BlockSpec((tile_n, P), in_index_map),   # hm_pred tile
            pl.BlockSpec((tile_n, P), in_index_map),   # hm_gt tile
            pl.BlockSpec((tile_n, 1), in_index_map),   # vis tile
        ],
        out_specs=pl.BlockSpec((acc_rows, P), lambda c, i: (c, 0)),
        out_shape=jax.ShapeDtypeStruct((num_chunks * acc_rows, P), jnp.float32),
        compiler_params=pltpu.CompilerParams(
            dimension_semantics=("parallel", "arbitrary"),
            vmem_limit_bytes=vmem_limit,
        ),
        cost_estimate=cost,
    )(hm_p, hm_g, vis)

    vis_f32 = vis_flag.astype(jnp.float32)
    vis_sum = jnp.sum(vis_f32)   # same precondition as reference: > 0 visible joints

    # Final 8->1 sublane and cross-lane collapses done once on the tiny partials.
    hm_loss = jnp.sum(partial_sse) / (vis_sum * P)

    # Tiny (B, J, D) branch in plain JAX (D=3 -> 3/128 lane occupancy in-kernel).
    p3_diff = pose_3d_pred.astype(jnp.float32) - pose_3d_gt.astype(jnp.float32)
    p3_loss = jnp.sum(jnp.mean(p3_diff * p3_diff, axis=2) * vis_f32) / vis_sum

    return hm_loss, p3_loss


def _reference(hm_pred, hm_gt, pose_3d_pred, pose_3d_gt, vis_flag):
    B, J = hm_pred.shape[:2]
    hp = hm_pred.reshape(B, J, -1).astype(jnp.float32)
    hg = hm_gt.reshape(B, J, -1).astype(jnp.float32)
    vf = vis_flag.astype(jnp.float32)
    hm_loss = jnp.mean((hp - hg) ** 2, axis=2) * vf
    hm_loss = jnp.sum(hm_loss) / jnp.sum(vf)
    pd = (pose_3d_pred.astype(jnp.float32) - pose_3d_gt.astype(jnp.float32))
    p3_loss = jnp.mean(pd ** 2, axis=2) * vf
    p3_loss = jnp.sum(p3_loss) / jnp.sum(vf)
    return hm_loss, p3_loss


if __name__ == "__main__":
    key = jax.random.PRNGKey(0)
    k1, k2, k3, k4, k5 = jax.random.split(key, 5)

    # Case 1: small, single tile / single chunk, f32.
    B, J, H, W, D = 2, 4, 16, 16, 3
    hm_pred = jax.random.normal(k1, (B, J, H, W), dtype=jnp.float32)
    hm_gt = jax.random.normal(k2, (B, J, H, W), dtype=jnp.float32)
    pose_3d_pred = jax.random.normal(k3, (B, J, D), dtype=jnp.float32)
    pose_3d_gt = jax.random.normal(k4, (B, J, D), dtype=jnp.float32)
    vis_flag = (jax.random.uniform(k5, (B, J)) > 0.3).astype(jnp.float32)
    vis_flag = vis_flag.at[0, 0].set(1.0)   # at least one visible joint

    hm_loss, p3_loss = pose3d_loss(hm_pred, hm_gt, pose_3d_pred, pose_3d_gt, vis_flag)
    jax.block_until_ready((hm_loss, p3_loss))
    ref_hm, ref_p3 = _reference(hm_pred, hm_gt, pose_3d_pred, pose_3d_gt, vis_flag)
    assert jnp.allclose(hm_loss, ref_hm, rtol=1e-5, atol=1e-6), (hm_loss, ref_hm)
    assert jnp.allclose(p3_loss, ref_p3, rtol=1e-5, atol=1e-6), (p3_loss, ref_p3)

    # Case 2: tiled path — bf16 inputs, 3 tiles (odd -> auto falls back to one
    # chunk), a partial last tile exercising the masked pl.when branch.
    B2, J2 = 5, 8   # N = 40; max_tile_n=16 -> 3 tiles, rem = 8
    kk = jax.random.split(jax.random.PRNGKey(1), 5)
    hm_pred2 = jax.random.normal(kk[0], (B2, J2, H, W), dtype=jnp.bfloat16)
    hm_gt2 = jax.random.normal(kk[1], (B2, J2, H, W), dtype=jnp.bfloat16)
    p3_pred2 = jax.random.normal(kk[2], (B2, J2, D), dtype=jnp.float32)
    p3_gt2 = jax.random.normal(kk[3], (B2, J2, D), dtype=jnp.float32)
    vis2 = (jax.random.uniform(kk[4], (B2, J2)) > 0.3).astype(jnp.float32)
    vis2 = vis2.at[0, 0].set(1.0)

    hm2, p32 = pose3d_loss(hm_pred2, hm_gt2, p3_pred2, p3_gt2, vis2, max_tile_n=16)
    jax.block_until_ready((hm2, p32))
    ref_hm2, ref_p32 = _reference(hm_pred2, hm_gt2, p3_pred2, p3_gt2, vis2)
    assert jnp.allclose(hm2, ref_hm2, rtol=1e-4, atol=1e-5), (hm2, ref_hm2)
    assert jnp.allclose(p32, ref_p32, rtol=1e-5, atol=1e-6), (p32, ref_p32)

    # Case 3: forced 2-chunk ("parallel") path — bf16, 4 tiles split 2x2, with a
    # partial last tile; exercises the exact-cover multi-chunk grid on any chip.
    B3, J3 = 7, 8   # N = 56; max_tile_n=16 -> 4 tiles, rem = 8
    kk3 = jax.random.split(jax.random.PRNGKey(2), 5)
    hm_pred3 = jax.random.normal(kk3[0], (B3, J3, H, W), dtype=jnp.bfloat16)
    hm_gt3 = jax.random.normal(kk3[1], (B3, J3, H, W), dtype=jnp.bfloat16)
    p3_pred3 = jax.random.normal(kk3[2], (B3, J3, D), dtype=jnp.float32)
    p3_gt3 = jax.random.normal(kk3[3], (B3, J3, D), dtype=jnp.float32)
    vis3 = (jax.random.uniform(kk3[4], (B3, J3)) > 0.3).astype(jnp.float32)
    vis3 = vis3.at[0, 0].set(1.0)

    hm3, p33 = pose3d_loss(hm_pred3, hm_gt3, p3_pred3, p3_gt3, vis3,
                           max_tile_n=16, force_num_chunks=2)
    jax.block_until_ready((hm3, p33))
    ref_hm3, ref_p33 = _reference(hm_pred3, hm_gt3, p3_pred3, p3_gt3, vis3)
    assert jnp.allclose(hm3, ref_hm3, rtol=1e-4, atol=1e-5), (hm3, ref_hm3)
    assert jnp.allclose(p33, ref_p33, rtol=1e-5, atol=1e-6), (p33, ref_p33)

    print("KERNEL_OK")
</pallas_src>

<mosaic_0001>
module attributes {stable_mosaic.version = 11 : i64} {
  func.func @kernel(%arg0: i32, %arg1: i32, %arg2: memref<8x256xf32, #tpu.memory_space<vmem>>, %arg3: memref<8x256xf32, #tpu.memory_space<vmem>>, %arg4: memref<8x1xf32, #tpu.memory_space<vmem>>, %arg5: memref<8x256xf32, #tpu.memory_space<vmem>>) attributes {dimension_semantics = [#tpu.dimension_semantics<parallel>, #tpu.dimension_semantics<arbitrary>], iteration_bounds = array<i64: 1, 1>, scalar_prefetch = 0 : i64, scratch_operands = 0 : i64, tpu.core_type = #tpu.core_type<tc>, window_params = [{transform_indices = @transform_0, window_bounds = array<i64: 8, 256>}, {transform_indices = @transform_1, window_bounds = array<i64: 8, 256>}, {transform_indices = @transform_2, window_bounds = array<i64: 8, 1>}, {transform_indices = @transform_3, window_bounds = array<i64: 8, 256>}]} {
    %c0_i32 = arith.constant 0 : i32
    %0 = arith.cmpi eq, %arg1, %c0_i32 : i32
    %1 = arith.extui %0 : i1 to i32
    %c0_i32_0 = arith.constant 0 : i32
    %2 = arith.cmpi ne, %1, %c0_i32_0 : i32
    scf.if %2 {
      %cst_10 = arith.constant 0.000000e+00 : f32
      %15 = vector.broadcast %cst_10 : f32 to vector<8x256xf32>
      %c0_11 = arith.constant 0 : index
      %c0_12 = arith.constant 0 : index
      %16 = vector.load %arg5[%c0_11, %c0_12] : memref<8x256xf32, #tpu.memory_space<vmem>>, vector<8x256xf32>
      tpu.vector_store %arg5[%c0_11, %c0_12], %15 {strides = array<i32>} : memref<8x256xf32, #tpu.memory_space<vmem>>, vector<8x256xf32>,
    } else {
    }
    %c0 = arith.constant 0 : index
    %c0_1 = arith.constant 0 : index
    %3 = vector.load %arg2[%c0, %c0_1] : memref<8x256xf32, #tpu.memory_space<vmem>>, vector<8x256xf32>
    %c0_2 = arith.constant 0 : index
    %c0_3 = arith.constant 0 : index
    %4 = vector.load %arg3[%c0_2, %c0_3] : memref<8x256xf32, #tpu.memory_space<vmem>>, vector<8x256xf32>
    %5 = arith.subf %3, %4 : vector<8x256xf32>
    %c0_4 = arith.constant 0 : index
    %c0_5 = arith.constant 0 : index
    %6 = vector.load %arg4[%c0_4, %c0_5] : memref<8x1xf32, #tpu.memory_space<vmem>>, vector<8x1xf32>
    %7 = arith.mulf %5, %5 : vector<8x256xf32>
    %8 = vector.broadcast %6 : vector<8x1xf32> to vector<8x256xf32>
    %9 = arith.mulf %7, %8 : vector<8x256xf32>
    %c0_6 = arith.constant 0 : index
    %c0_7 = arith.constant 0 : index
    %10 = vector.load %arg5[%c0_6, %c0_7] : memref<8x256xf32, #tpu.memory_space<vmem>>, vector<8x256xf32>
    %11 = vector.shape_cast %9 : vector<8x256xf32> to vector<1x8x256xf32>
    %cst = arith.constant dense<0.000000e+00> : vector<8x256xf32>
    %12 = vector.multi_reduction <add>, %11, %cst [0] : vector<1x8x256xf32> to vector<8x256xf32>
    %13 = arith.addf %10, %12 : vector<8x256xf32>
    %c0_8 = arith.constant 0 : index
    %c0_9 = arith.constant 0 : index
    %14 = vector.load %arg5[%c0_8, %c0_9] : memref<8x256xf32, #tpu.memory_space<vmem>>, vector<8x256xf32>
    tpu.vector_store %arg5[%c0_8, %c0_9], %13 {strides = array<i32>} : memref<8x256xf32, #tpu.memory_space<vmem>>, vector<8x256xf32>,
    return
  }
  func.func @transform_0(%arg0: i32, %arg1: i32) -> (i32, i32) {
    %c1_i32 = arith.constant 1 : i32
    %0 = arith.muli %arg0, %c1_i32 : i32
    %1 = arith.addi %0, %arg1 : i32
    %c0_i32 = arith.constant 0 : i32
    %c0_i32_0 = arith.constant 0 : i32
    return %1, %c0_i32 : i32, i32
  }
  func.func @transform_1(%arg0: i32, %arg1: i32) -> (i32, i32) {
    %c1_i32 = arith.constant 1 : i32
    %0 = arith.muli %arg0, %c1_i32 : i32
    %1 = arith.addi %0, %arg1 : i32
    %c0_i32 = arith.constant 0 : i32
    %c0_i32_0 = arith.constant 0 : i32
    return %1, %c0_i32 : i32, i32
  }
  func.func @transform_2(%arg0: i32, %arg1: i32) -> (i32, i32) {
    %c1_i32 = arith.constant 1 : i32
    %0 = arith.muli %arg0, %c1_i32 : i32
    %1 = arith.addi %0, %arg1 : i32
    %c0_i32 = arith.constant 0 : i32
    %c0_i32_0 = arith.constant 0 : i32
    return %1, %c0_i32 : i32, i32
  }
  func.func @transform_3(%arg0: i32, %arg1: i32) -> (i32, i32) {
    %c0_i32 = arith.constant 0 : i32
    %c0_i32_0 = arith.constant 0 : i32
    return %arg0, %c0_i32 : i32, i32
  }
}

</mosaic_0001>

<llo_original>
// kernel: tpu_custom_call.1
$region0: #{tpu_custom_call.1}
  #allocation0 [shape = 'u32[]', space=smem, size = 0x4, offset = 0x4, fixed_abs, tag = 'smem constant byte address 0x4 - core index']
  #allocation1 [shape = 'u32[144,128]{1,0:T(1,128)}', space=vmem, size = 0x12000, scoped, tag = 'internal scratch']
  %s0 = inlined_call_operand.hbm [shape: f32[8,256], index: 0, kind: input, shape index: {}]
  %s1 = inlined_call_operand.hbm [shape: f32[8,256], index: 1, kind: input, shape index: {}]
  %s2 = inlined_call_operand.vmem [shape: f32[8,1], index: 2, kind: input, shape index: {}]
  %s3 = inlined_call_operand.hbm [shape: f32[8,256], index: 3, kind: output, shape index: {}]
  %s4 = sld [smem:[#allocation0]]
  $region34: #{tpu_custom_call.1} parent=0
    _
  %s6 = ssub.s32 1, %s4
  %s7 = scalar_select 0, %s6, %s4
  $region1: #{tpu_custom_call.1} parent=0
    #allocation2 [shape = 'u8[8192]{0}', space=vmem, size = 0x2000, scoped, tag = 'input window, operand 0, single buffered']
    #allocation3 [shape = 's32[1]{0}', space=sflag, size = 0x4, scoped, tag = 'scoped memory for tpu_custom_call.1']
    #allocation4 [shape = 's32[1]{0}', space=sflag, size = 0x4, scoped, tag = 'scoped memory for tpu_custom_call.1']
    #allocation5 [shape = 'u8[8192]{0}', space=vmem, size = 0x2000, scoped, tag = 'input window, operand 1, single buffered']
    #allocation6 [shape = 's32[1]{0}', space=sflag, size = 0x4, scoped, tag = 'scoped memory for tpu_custom_call.1']
    #allocation7 [shape = 'u8[8192]{0}', space=vmem, size = 0x2000, scoped, tag = 'output window, operand 0, single buffered']
    %8 = vsyncpa [#allocation3], 0
    %9 = vsyncpa [#allocation6], 0
    %10 = vsyncpa [#allocation4], 0
    // Predicated region
    $region2: #{tpu_custom_call.1} parent=1 // pred_check
      _
    $region3: #{tpu_custom_call.1} parent=1 // pred_check_branch
      %12 = sbr.rel (0) target = $region5
    $region4: #{tpu_custom_call.1} parent=1 // pred_region
      %s13 = sadd.s32 0, 0
      %s15 = ssub.s32 256, 256
      %16 = vsyncadd [#allocation3], %s15
      %s17 = smul.addr %s13, 2
      %s18 = smul.addr %s17, 128
      %s19 = scalar_lea.hbm %s0, %s18
      %s21 = sshll.u32 [#allocation2], 4
      %s22 = int_to_ptr.vmem [resolvable:$true] %s21
      %24 = dma.hbm_to_vmem [thread:$0]  %s19, 256, %s22, [#allocation3]
    $region5: #{tpu_custom_call.1} parent=1 // pred_fallthru
      _
    // Predicated region
    $region6: #{tpu_custom_call.1} parent=1 // pred_check
      _
    $region7: #{tpu_custom_call.1} parent=1 // pred_check_branch
      %26 = sbr.rel (0) target = $region9
    $region8: #{tpu_custom_call.1} parent=1 // pred_region
      %s27 = sadd.s32 0, 0
      %s29 = ssub.s32 256, 256
      %30 = vsyncadd [#allocation6], %s29
      %s31 = smul.addr %s27, 2
      %s32 = smul.addr %s31, 128
      %s33 = scalar_lea.hbm %s1, %s32
      %s35 = sshll.u32 [#allocation5], 4
      %s36 = int_to_ptr.vmem [resolvable:$true] %s35
      %38 = dma.hbm_to_vmem [thread:$0]  %s33, 256, %s36, [#allocation6]
    $region9: #{tpu_custom_call.1} parent=1 // pred_fallthru
      _
    // Predicated region
    $region10: #{tpu_custom_call.1} parent=1 // pred_check
      _
    $region11: #{tpu_custom_call.1} parent=1 // pred_check_branch
      %40 = sbr.rel (0) target = $region13
    $region12: #{tpu_custom_call.1} parent=1 // pred_region
      %s41 = sadd.s32 0, 0
      %p42 = scmp.lt.s32.totalorder %s41, 0
      %s43 = scalar_select %p42, %s41, 0
      %s44 = smul.addr %s43, 8
      %s45 = scalar_lea.vmem %s2, %s44
      %s46 = sadd.s32 0, 0
    $region13: #{tpu_custom_call.1} parent=1 // pred_fallthru
      _
    // Predicated region
    $region14: #{tpu_custom_call.1} parent=1 // pred_check
      _
    $region15: #{tpu_custom_call.1} parent=1 // pred_check_branch
      %48 = sbr.rel (0) target = $region17
    $region16: #{tpu_custom_call.1} parent=1 // pred_region
      %49 = dma.done [#allocation3], 256
    $region17: #{tpu_custom_call.1} parent=1 // pred_fallthru
      _
    // Predicated region
    $region18: #{tpu_custom_call.1} parent=1 // pred_check
      _
    $region19: #{tpu_custom_call.1} parent=1 // pred_check_branch
      %51 = sbr.rel (0) target = $region21
    $region20: #{tpu_custom_call.1} parent=1 // pred_region
      %52 = dma.done [#allocation6], 256
    $region21: #{tpu_custom_call.1} parent=1 // pred_fallthru
      _
    %s53 = sadd.s32 0, 0
    %p54 = scmp.lt.s32.totalorder %s53, 0
    %s55 = scalar_select %p54, %s53, 0
    %s56 = smul.addr %s55, 8
    %s57 = scalar_lea.vmem %s2, %s56
    %s58 = sadd.s32 0, 0
    %s59 = sadd.s32 0, 0
    %s60 = sadd.s32 0, 0
    %p61 = scmp.lt.s32.totalorder %s60, 0
    %s62 = scalar_select %p61, %s60, 0
    %s63 = smul.addr %s62, 8
    %s64 = scalar_lea.vmem %s2, %s63
    %s65 = sadd.s32 0, 0
    %p66 = scmp.eq.s32.totalorder 0, 0
    // Predicated region
    $region22: #{tpu_custom_call.1} parent=1 // pred_check
      %p67 = pneg %p66
    $region23: #{tpu_custom_call.1} parent=1 // pred_check_branch
      %69 = sbr.rel (%p67) target = $region25
    $region24: #{tpu_custom_call.1} parent=1 // pred_region
      %70 = vst [vmem:[#allocation7] sm:$0xff] 0.0
      %71 = vst [vmem:[#allocation7 + $0x8] sm:$0xff] 0.0
    $region25: #{tpu_custom_call.1} parent=1 // pred_fallthru
      _
    %v72 = vld [vmem:[#allocation2] sm:$0xff]
    %v73 = vld [vmem:[#allocation2 + $0x8] sm:$0xff]
    %v74 = vld [vmem:[#allocation5] sm:$0xff]
    %v75 = vld [vmem:[#allocation5 + $0x8] sm:$0xff]
    %v76 = vsub.f32 %v72, %v74
    %v77 = vsub.f32 %v73, %v75
    %v78 = vld [vmem:[%s64] sm:$0xff]
    %v79 = vmul.f32 %v76, %v76
    %v80 = vmul.f32 %v77, %v77
    %82 = vset.pattern.permute.xlu0 0
    %83 = vperm.xlu0 %82, %v78
    %v84 = vpop.permute.xlu0 %83
    %v86 = vmul.f32 %v79, %v84
    %v87 = vmul.f32 %v80, %v84
    %v88 = vld [vmem:[#allocation7] sm:$0xff]
    %v89 = vld [vmem:[#allocation7 + $0x8] sm:$0xff]
    %v90 = vadd.f32 %v86, 0.0
    %v91 = vadd.f32 %v87, 0.0
    %v92 = vadd.f32 %v88, %v90
    %v93 = vadd.f32 %v89, %v91
    %94 = vst [vmem:[#allocation7] sm:$0xff] %v92
    %95 = vst [vmem:[#allocation7 + $0x8] sm:$0xff] %v93
    // Predicated region
    $region26: #{tpu_custom_call.1} parent=1 // pred_check
      _
    $region27: #{tpu_custom_call.1} parent=1 // pred_check_branch
      %97 = sbr.rel (0) target = $region29
    $region28: #{tpu_custom_call.1} parent=1 // pred_region
      %s99 = ssub.s32 256, 256
      %100 = vsyncadd [#allocation4], %s99
      %s102 = sshll.u32 [#allocation7], 4
      %s103 = int_to_ptr.vmem [resolvable:$true] %s102
      %105 = dma.vmem_to_hbm [thread:$0]  %s103, 256, %s3, [#allocation4]
    $region29: #{tpu_custom_call.1} parent=1 // pred_fallthru
      _
    // Predicated region
    $region30: #{tpu_custom_call.1} parent=1 // pred_check
      _
    $region31: #{tpu_custom_call.1} parent=1 // pred_check_branch
      %107 = sbr.rel (0) target = $region33
    $region32: #{tpu_custom_call.1} parent=1 // pred_region
      %108 = dma.done [#allocation4], 256
    $region33: #{tpu_custom_call.1} parent=1 // pred_fallthru
      _
    %109 = vsyncpa [#allocation3], 1
    %110 = vsyncpa [#allocation6], 1
    %111 = vsyncpa [#allocation4], 1

</llo_original>
